<compile_context>
chip_gen: v7x
topology: tpu7x:2x2x1
jax: 0.10.0
libtpu: 0.0.40
codegen_flags: <defaults>
</compile_context>

<pallas_src>
import math

import jax
import jax.numpy as jnp
from jax.experimental import pallas as pl
from jax.experimental.pallas import tpu as pltpu


def attention_kernel(hid_ref, enc_ref, wh_t_ref, we_t_ref, bias_ref, v_ref, out_ref):
    """One grid step handles one block of the batch dimension.

    hid_ref  : [bB, H]      decoder hidden state block
    enc_ref  : [T, bB, H]   encoder outputs block (time-major, GRU-native layout)
    wh_t_ref : [H, H]       attn.weight[:, :H].T  (pre-transposed on the host)
    we_t_ref : [H, H]       attn.weight[:, H:].T  (pre-transposed on the host)
    bias_ref : [1, H]       attn.bias
    v_ref    : [1, H]       scoring vector v
    out_ref  : [bB, T]      softmax attention weights (lane-dense: T on lanes)
    """
    hid = hid_ref[...]
    enc = enc_ref[...]
    wh_t = wh_t_ref[...]
    we_t = we_t_ref[...]
    v_row = v_ref[...]                                   # [1, H]

    # Hidden projection + bias, folded once at [bB, H] (not on the full [T,bB,H]).
    hb = jnp.dot(hid, wh_t, preferred_element_type=jnp.float32) + bias_ref[...]

    # Encoder projection: single contraction over H, no batch dims -> the
    # leading T*bB rows collapse into one flattened [T*bB, H] @ [H, H] matmul.
    eproj = jax.lax.dot_general(
        enc, we_t,
        dimension_numbers=(((2,), (0,)), ((), ())),
        preferred_element_type=jnp.float32)              # [T, bB, H]

    energy = jnp.tanh(eproj + hb[None, :, :])            # [T, bB, H]  (tanh -> EUP)

    # score[t, b] = sum_h v[h] * energy[t, b, h]   (H on lanes -> lane reduce)
    scores_tb = jnp.sum(energy * v_row[None, :, :], axis=-1)    # [T, bB]

    # Small 2-D transpose to the lane-dense store orientation, then a
    # numerically stable softmax over T (last axis, on lanes).
    s = scores_tb.T                                      # [bB, T]
    m = jnp.max(s, axis=-1, keepdims=True)
    e = jnp.exp(s - m)
    denom = jnp.sum(e, axis=-1, keepdims=True)
    out_ref[...] = (e * pl.reciprocal(denom, approx=True)).astype(out_ref.dtype)


def _pick_block_b(batch):
    """Largest 8-aligned divisor of `batch` (capped at 128), else the full batch."""
    for cand in (128, 64, 32, 16, 8):
        if batch % cand == 0:
            return cand
    return batch


def attention_forward(hidden, encoder_outputs, w, b, v):
    """hidden: [B, H] f32, encoder_outputs: [T, B, H] f32 (PyTorch convention).

    Returns [B, 1, T] softmax attention weights, matching the torch module.
    """
    T, B, H = encoder_outputs.shape

    # Parameter prep done once outside the kernel (constants, free under jit).
    wh_t = w[:, :H].T            # [H, H]  applied to hidden
    we_t = w[:, H:].T            # [H, H]  applied to encoder outputs
    bias = b.reshape(1, H)
    v_row = v.reshape(1, H)

    block_b = _pick_block_b(B)
    grid = (B // block_b,)

    # NOTE: for very large T*H, tile T as a second ("arbitrary") grid axis with
    # an online-softmax accumulator to cap VMEM; not needed at these sizes.
    out = pl.pallas_call(
        attention_kernel,
        out_shape=jax.ShapeDtypeStruct((B, T), jnp.float32),
        grid=grid,
        in_specs=[
            pl.BlockSpec((block_b, H), lambda i: (i, 0)),        # hidden
            pl.BlockSpec((T, block_b, H), lambda i: (0, i, 0)),  # encoder outputs
            pl.BlockSpec((H, H), lambda i: (0, 0)),              # Wh^T
            pl.BlockSpec((H, H), lambda i: (0, 0)),              # We^T
            pl.BlockSpec((1, H), lambda i: (0, 0)),              # bias
            pl.BlockSpec((1, H), lambda i: (0, 0)),              # v
        ],
        out_specs=pl.BlockSpec((block_b, T), lambda i: (i, 0)),
        compiler_params=pltpu.CompilerParams(
            dimension_semantics=("parallel",)),                  # 2 TCs on v7x
    )(hidden, encoder_outputs, wh_t, we_t, bias, v_row)

    # unsqueeze(1) of the tiny [B, T] result is a free reshape outside the kernel.
    return out[:, None, :]


def attention_ref(hidden, encoder_outputs, w, b, v):
    """Pure-JAX reference reproducing the PyTorch forward semantics."""
    T, B, H = encoder_outputs.shape
    h = jnp.broadcast_to(hidden[None], (T, B, H)).transpose(1, 0, 2)     # [B, T, H]
    enc = encoder_outputs.transpose(1, 0, 2)                             # [B, T, H]
    cat = jnp.concatenate([h, enc], axis=2)                              # [B, T, 2H]
    energy = jnp.tanh(cat @ w.T + b)                                     # [B, T, H]
    scores = jnp.einsum('bth,h->bt', energy, v)                          # [B, T]
    return jax.nn.softmax(scores, axis=1)[:, None, :]                    # [B, 1, T]


if __name__ == "__main__":
    B, T, H = 2, 8, 32
    key = jax.random.PRNGKey(0)
    k_hid, k_enc, k_w, k_b, k_v = jax.random.split(key, 5)

    hidden = jax.random.normal(k_hid, (B, H), dtype=jnp.float32)
    encoder_outputs = jax.random.normal(k_enc, (T, B, H), dtype=jnp.float32)

    # Deterministic parameter init mirroring nn.Linear / nn.Parameter shapes.
    lin_bound = 1.0 / math.sqrt(2 * H)
    w = jax.random.uniform(k_w, (H, 2 * H), jnp.float32, -lin_bound, lin_bound)
    b = jax.random.uniform(k_b, (H,), jnp.float32, -lin_bound, lin_bound)
    stdv = 1.0 / math.sqrt(H)
    v = stdv * jax.random.normal(k_v, (H,), dtype=jnp.float32)

    fwd = jax.jit(attention_forward)
    out = jax.block_until_ready(fwd(hidden, encoder_outputs, w, b, v))

    ref = attention_ref(hidden, encoder_outputs, w, b, v)
    assert out.shape == (B, 1, T), out.shape
    # Tolerance accommodates the approximate (EUP) reciprocal in the softmax.
    assert jnp.allclose(out, ref, atol=2e-3, rtol=2e-3), "mismatch vs reference"

    print("KERNEL_OK")
</pallas_src>

<mosaic_0001>
module attributes {stable_mosaic.version = 11 : i64} {
  func.func @attention_kernel(%arg0: i32, %arg1: memref<2x32xf32, #tpu.memory_space<vmem>>, %arg2: memref<8x2x32xf32, #tpu.memory_space<vmem>>, %arg3: memref<32x32xf32, #tpu.memory_space<vmem>>, %arg4: memref<32x32xf32, #tpu.memory_space<vmem>>, %arg5: memref<1x32xf32, #tpu.memory_space<vmem>>, %arg6: memref<1x32xf32, #tpu.memory_space<vmem>>, %arg7: memref<2x8xf32, #tpu.memory_space<vmem>>) attributes {dimension_semantics = [#tpu.dimension_semantics<parallel>], iteration_bounds = array<i64: 1>, scalar_prefetch = 0 : i64, scratch_operands = 0 : i64, tpu.core_type = #tpu.core_type<tc>, window_params = [{transform_indices = @transform_0, window_bounds = array<i64: 2, 32>}, {transform_indices = @transform_1, window_bounds = array<i64: 8, 2, 32>}, {pipeline_mode = #tpu.pipeline_mode<synchronous>, transform_indices = @transform_2, window_bounds = array<i64: 32, 32>}, {pipeline_mode = #tpu.pipeline_mode<synchronous>, transform_indices = @transform_3, window_bounds = array<i64: 32, 32>}, {pipeline_mode = #tpu.pipeline_mode<synchronous>, transform_indices = @transform_4, window_bounds = array<i64: 1, 32>}, {pipeline_mode = #tpu.pipeline_mode<synchronous>, transform_indices = @transform_5, window_bounds = array<i64: 1, 32>}, {transform_indices = @transform_6, window_bounds = array<i64: 2, 8>}]} {
    %c0 = arith.constant 0 : index
    %c0_0 = arith.constant 0 : index
    %0 = vector.load %arg1[%c0, %c0_0] : memref<2x32xf32, #tpu.memory_space<vmem>>, vector<2x32xf32>
    %c0_1 = arith.constant 0 : index
    %c0_2 = arith.constant 0 : index
    %c0_3 = arith.constant 0 : index
    %1 = vector.load %arg2[%c0_1, %c0_2, %c0_3] : memref<8x2x32xf32, #tpu.memory_space<vmem>>, vector<8x2x32xf32>
    %c0_4 = arith.constant 0 : index
    %c0_5 = arith.constant 0 : index
    %2 = vector.load %arg3[%c0_4, %c0_5] : memref<32x32xf32, #tpu.memory_space<vmem>>, vector<32x32xf32>
    %c0_6 = arith.constant 0 : index
    %c0_7 = arith.constant 0 : index
    %3 = vector.load %arg4[%c0_6, %c0_7] : memref<32x32xf32, #tpu.memory_space<vmem>>, vector<32x32xf32>
    %c0_8 = arith.constant 0 : index
    %c0_9 = arith.constant 0 : index
    %4 = vector.load %arg6[%c0_8, %c0_9] : memref<1x32xf32, #tpu.memory_space<vmem>>, vector<1x32xf32>
    %cst = arith.constant dense<0.000000e+00> : vector<2x32xf32>
    %5 = tpu.matmul %0, %2, %cst {dimension_numbers = #tpu.dot_dimension_numbers<[1], [0], [0], [1], [0, 0, 1, 1], [], []>} : vector<2x32xf32>, vector<32x32xf32>, vector<2x32xf32> -> vector<2x32xf32>
    %c0_10 = arith.constant 0 : index
    %c0_11 = arith.constant 0 : index
    %6 = vector.load %arg5[%c0_10, %c0_11] : memref<1x32xf32, #tpu.memory_space<vmem>>, vector<1x32xf32>
    %7 = vector.broadcast %6 : vector<1x32xf32> to vector<2x32xf32>
    %8 = arith.addf %5, %7 : vector<2x32xf32>
    %cst_12 = arith.constant dense<0.000000e+00> : vector<8x2x32xf32>
    %9 = tpu.matmul %1, %3, %cst_12 {dimension_numbers = #tpu.dot_dimension_numbers<[2], [0], [0, 1], [1], [0, 0, 0, 1, 1, 1], [], []>} : vector<8x2x32xf32>, vector<32x32xf32>, vector<8x2x32xf32> -> vector<8x2x32xf32>
    %10 = vector.shape_cast %8 : vector<2x32xf32> to vector<1x2x32xf32>
    %11 = vector.broadcast %10 : vector<1x2x32xf32> to vector<8x2x32xf32>
    %12 = arith.addf %9, %11 : vector<8x2x32xf32>
    %13 = math.tanh %12 : vector<8x2x32xf32>
    %14 = vector.shape_cast %4 : vector<1x32xf32> to vector<1x1x32xf32>
    %15 = vector.broadcast %14 : vector<1x1x32xf32> to vector<8x2x32xf32>
    %16 = arith.mulf %13, %15 : vector<8x2x32xf32>
    %cst_13 = arith.constant dense<0.000000e+00> : vector<8x2xf32>
    %17 = vector.multi_reduction <add>, %16, %cst_13 [2] : vector<8x2x32xf32> to vector<8x2xf32>
    %18 = tpu.transpose %17, [1, 0] : vector<8x2xf32> -> vector<2x8xf32>
    %cst_14 = arith.constant dense<0xFF800000> : vector<2xf32>
    %19 = vector.multi_reduction <maximumf>, %18, %cst_14 [1] : vector<2x8xf32> to vector<2xf32>
    %20 = vector.shape_cast %19 : vector<2xf32> to vector<2x1xf32>
    %21 = vector.broadcast %20 : vector<2x1xf32> to vector<2x8xf32>
    %22 = arith.subf %18, %21 : vector<2x8xf32>
    %23 = math.exp %22 : vector<2x8xf32>
    %cst_15 = arith.constant dense<0.000000e+00> : vector<2xf32>
    %24 = vector.multi_reduction <add>, %23, %cst_15 [1] : vector<2x8xf32> to vector<2xf32>
    %25 = vector.shape_cast %24 : vector<2xf32> to vector<2x1xf32>
    %26 = tpu.reciprocal %25 {approx = true} : vector<2x1xf32> -> vector<2x1xf32>
    %27 = vector.broadcast %26 : vector<2x1xf32> to vector<2x8xf32>
    %28 = arith.mulf %23, %27 : vector<2x8xf32>
    %c0_16 = arith.constant 0 : index
    %c0_17 = arith.constant 0 : index
    %29 = vector.load %arg7[%c0_16, %c0_17] : memref<2x8xf32, #tpu.memory_space<vmem>>, vector<2x8xf32>
    tpu.vector_store %arg7[%c0_16, %c0_17], %28 {strides = array<i32>} : memref<2x8xf32, #tpu.memory_space<vmem>>, vector<2x8xf32>,
    return
  }
  func.func @transform_0(%arg0: i32) -> (i32, i32) {
    %c0_i32 = arith.constant 0 : i32
    %c0_i32_0 = arith.constant 0 : i32
    return %arg0, %c0_i32 : i32, i32
  }
  func.func @transform_1(%arg0: i32) -> (i32, i32, i32) {
    %c0_i32 = arith.constant 0 : i32
    %c0_i32_0 = arith.constant 0 : i32
    %c0_i32_1 = arith.constant 0 : i32
    return %c0_i32, %arg0, %c0_i32_0 : i32, i32, i32
  }
  func.func @transform_2(%arg0: i32) -> (i32, i32) {
    %c0_i32 = arith.constant 0 : i32
    %c0_i32_0 = arith.constant 0 : i32
    %c0_i32_1 = arith.constant 0 : i32
    return %c0_i32, %c0_i32_0 : i32, i32
  }
  func.func @transform_3(%arg0: i32) -> (i32, i32) {
    %c0_i32 = arith.constant 0 : i32
    %c0_i32_0 = arith.constant 0 : i32
    %c0_i32_1 = arith.constant 0 : i32
    return %c0_i32, %c0_i32_0 : i32, i32
  }
  func.func @transform_4(%arg0: i32) -> (i32, i32) {
    %c0_i32 = arith.constant 0 : i32
    %c0_i32_0 = arith.constant 0 : i32
    %c0_i32_1 = arith.constant 0 : i32
    return %c0_i32, %c0_i32_0 : i32, i32
  }
  func.func @transform_5(%arg0: i32) -> (i32, i32) {
    %c0_i32 = arith.constant 0 : i32
    %c0_i32_0 = arith.constant 0 : i32
    %c0_i32_1 = arith.constant 0 : i32
    return %c0_i32, %c0_i32_0 : i32, i32
  }
  func.func @transform_6(%arg0: i32) -> (i32, i32) {
    %c0_i32 = arith.constant 0 : i32
    %c0_i32_0 = arith.constant 0 : i32
    return %arg0, %c0_i32 : i32, i32
  }
}

</mosaic_0001>

<llo_original>
// kernel: attention_forward.1
$region0: #{attention_forward.1}
  #allocation0 [shape = 'u32[]', space=smem, size = 0x4, offset = 0x4, fixed_abs, tag = 'smem constant byte address 0x4 - core index']
  #allocation1 [shape = 'u32[144,128]{1,0:T(1,128)}', space=vmem, size = 0x12000, scoped, tag = 'internal scratch']
  %s0 = inlined_call_operand.vmem [shape: f32[2,32], index: 0, kind: input, shape index: {}]
  %s1 = inlined_call_operand.vmem [shape: f32[8,2,32], index: 1, kind: input, shape index: {}]
  %s2 = inlined_call_operand.vmem [shape: f32[32,32], index: 2, kind: input, shape index: {}]
  %s3 = inlined_call_operand.vmem [shape: f32[32,32], index: 3, kind: input, shape index: {}]
  %s4 = inlined_call_operand.vmem [shape: f32[1,32], index: 4, kind: input, shape index: {}]
  %s5 = inlined_call_operand.vmem [shape: f32[1,32], index: 5, kind: input, shape index: {}]
  %s6 = inlined_call_operand.hbm [shape: f32[2,8], index: 6, kind: output, shape index: {}]
  %s7 = sld [smem:[#allocation0]]
  $region34: #{attention_forward.1} parent=0
    _
  %s9 = ssub.s32 1, %s7
  %s10 = scalar_select 0, %s9, %s7
  $region1: #{attention_forward.1} parent=0
    #allocation2 [shape = 'u8[1024]{0}', space=vmem, size = 0x400, scoped, tag = 'output window, operand 0, single buffered']
    #allocation3 [shape = 's32[1]{0}', space=sflag, size = 0x4, scoped, tag = 'scoped memory for attention_forward.1']
    %11 = vsyncpa [#allocation3], 0
    // Predicated region
    $region2: #{attention_forward.1} parent=1 // pred_check
      _
    $region3: #{attention_forward.1} parent=1 // pred_check_branch
      %13 = sbr.rel (0) target = $region5
    $region4: #{attention_forward.1} parent=1 // pred_region
      _
    $region5: #{attention_forward.1} parent=1 // pred_fallthru
      _
    // Predicated region
    $region6: #{attention_forward.1} parent=1 // pred_check
      _
    $region7: #{attention_forward.1} parent=1 // pred_check_branch
      %15 = sbr.rel (0) target = $region9
    $region8: #{attention_forward.1} parent=1 // pred_region
      _
    $region9: #{attention_forward.1} parent=1 // pred_fallthru
      _
    // Predicated region
    $region10: #{attention_forward.1} parent=1 // pred_check
      _
    $region11: #{attention_forward.1} parent=1 // pred_check_branch
      %17 = sbr.rel (0) target = $region13
    $region12: #{attention_forward.1} parent=1 // pred_region
      _
    $region13: #{attention_forward.1} parent=1 // pred_fallthru
      _
    // Predicated region
    $region14: #{attention_forward.1} parent=1 // pred_check
      _
    $region15: #{attention_forward.1} parent=1 // pred_check_branch
      %19 = sbr.rel (0) target = $region17
    $region16: #{attention_forward.1} parent=1 // pred_region
      _
    $region17: #{attention_forward.1} parent=1 // pred_fallthru
      _
    // Predicated region
    $region18: #{attention_forward.1} parent=1 // pred_check
      _
    $region19: #{attention_forward.1} parent=1 // pred_check_branch
      %21 = sbr.rel (0) target = $region21
    $region20: #{attention_forward.1} parent=1 // pred_region
      _
    $region21: #{attention_forward.1} parent=1 // pred_fallthru
      _
    // Predicated region
    $region22: #{attention_forward.1} parent=1 // pred_check
      _
    $region23: #{attention_forward.1} parent=1 // pred_check_branch
      %23 = sbr.rel (0) target = $region25
    $region24: #{attention_forward.1} parent=1 // pred_region
      _
    $region25: #{attention_forward.1} parent=1 // pred_fallthru
      _
    %v24 = vld [vmem:[%s0] sm:$0x3]
    %v25 = vld [vmem:[%s1] sm:$0x3]
    %v26 = vld [vmem:[%s1 + $0x2] sm:$0x3]
    %v27 = vld [vmem:[%s1 + $0x4] sm:$0x3]
    %v28 = vld [vmem:[%s1 + $0x6] sm:$0x3]
    %v29 = vld [vmem:[%s1 + $0x8] sm:$0x3]
    %v30 = vld [vmem:[%s1 + $0xa] sm:$0x3]
    %v31 = vld [vmem:[%s1 + $0xc] sm:$0x3]
    %v32 = vld [vmem:[%s1 + $0xe] sm:$0x3]
    %v33 = vld [vmem:[%s2] sm:$0xff]
    %v34 = vld [vmem:[%s2 + $0x8] sm:$0xff]
    %v35 = vld [vmem:[%s2 + $0x10] sm:$0xff]
    %v36 = vld [vmem:[%s2 + $0x18] sm:$0xff]
    %v37 = vld [vmem:[%s3] sm:$0xff]
    %v38 = vld [vmem:[%s3 + $0x8] sm:$0xff]
    %v39 = vld [vmem:[%s3 + $0x10] sm:$0xff]
    %v40 = vld [vmem:[%s3 + $0x18] sm:$0xff]
    %v41 = vld [vmem:[%s5] sm:$0x1]
    %v42 = vld [vmem:[%s4] sm:$0x1]
    %v44 = vlaneseq
    %v45 = vshrl.u32 %v44, 7
    %v46 = vsub.s32 0, %v45
    %v47 = vrot.slane %v42, %v46
    %vm49 = vcmask 261120
    %v51 = vsel %vm49, %v24, 0
    %53 = vmatprep.subr.mxu0 0.0
    %54 = vmatpush1.msra.mxu0 %v33
    %55 = vmatprep.subr.mxu0 0.0
    %56 = vmatpush1.msra.mxu0 %v34
    %57 = vmatprep.subr.mxu0 0.0
    %58 = vmatpush1.msra.mxu0 %v35
    %59 = vmatprep.subr.mxu0 0.0
    %60 = vmatpush1.msra.mxu0 %v36
    %61 = vmatprep.subr.mxu0 0.0
    %62 = vmatpush1.msra.mxu0 0.0
    %63 = vmatprep.subr.mxu0 0.0
    %64 = vmatpush1.msra.mxu0 0.0
    %65 = vmatprep.subr.mxu0 0.0
    %66 = vmatpush1.msra.mxu0 0.0
    %67 = vmatprep.subr.mxu0 0.0
    %68 = vmatpush1.msra.mxu0 0.0
    %69 = vmatprep.subr.mxu0 0.0
    %70 = vmatpush1.msra.mxu0 0.0
    %71 = vmatprep.subr.mxu0 0.0
    %72 = vmatpush1.msra.mxu0 0.0
    %73 = vmatprep.subr.mxu0 0.0
    %74 = vmatpush1.msra.mxu0 0.0
    %75 = vmatprep.subr.mxu0 0.0
    %76 = vmatpush1.msra.mxu0 0.0
    %77 = vmatprep.subr.mxu0 0.0
    %78 = vmatpush1.msra.mxu0 0.0
    %79 = vmatprep.subr.mxu0 0.0
    %80 = vmatpush1.msra.mxu0 0.0
    %81 = vmatprep.subr.mxu0 0.0
    %82 = vmatpush1.msra.mxu0 0.0
    %83 = vmatprep.subr.mxu0 0.0
    %84 = vmatpush1.msra.mxu0 0.0
    %85 = vmatprep.subr.mxu0 0.0
    %86 = vmatpush1.msra.mxu0 0.0
    %87 = vmatprep.subr.mxu0 0.0
    %88 = vmatpush1.msra.mxu0 0.0
    %89 = vmatprep.subr.mxu0 0.0
    %90 = vmatpush1.msra.mxu0 0.0
    %91 = vmatprep.subr.mxu0 0.0
    %92 = vmatpush1.msra.mxu0 0.0
    %93 = vmatprep.subr.mxu0 0.0
    %94 = vmatpush1.msra.mxu0 0.0
    %95 = vmatprep.subr.mxu0 0.0
    %96 = vmatpush1.msra.mxu0 0.0
    %97 = vmatprep.subr.mxu0 0.0
    %98 = vmatpush1.msra.mxu0 0.0
    %99 = vmatprep.subr.mxu0 0.0
    %100 = vmatpush1.msra.mxu0 0.0
    %101 = vmatprep.subr.mxu0 0.0
    %102 = vmatpush1.msra.mxu0 0.0
    %103 = vmatprep.subr.mxu0 0.0
    %104 = vmatpush1.msra.mxu0 0.0
    %105 = vmatprep.subr.mxu0 0.0
    %106 = vmatpush1.msra.mxu0 0.0
    %107 = vmatprep.subr.mxu0 0.0
    %108 = vmatpush1.msra.mxu0 0.0
    %109 = vmatprep.subr.mxu0 0.0
    %110 = vmatpush1.msra.mxu0 0.0
    %111 = vmatprep.subr.mxu0 0.0
    %112 = vmatpush1.msra.mxu0 0.0
    %113 = vmatprep.subr.mxu0 0.0
    %114 = vmatpush1.msra.mxu0 0.0
    %115 = vmatprep.subr.mxu0 0.0
    %116 = vmatpush1.msra.mxu0 0.0
    %117 = vmatprep.mubr.f32.mxu0 0.0
    %118 = vmatmul.mubr.f32.gmra.mrb[0].mxu0 %v51
    %v119 = vpop.f32.mrb[0].mxu0
    %v120 = vadd.f32 %v47, %v119
    %v121 = vpop.f32.mrb[0].mxu0
    %122 = vdwg.mxu0
    %v131 = vcombine.low %v25, %v26
    %v132 = vcombine.low %v27, %v28
    %v134 = vunpack.c.l.s4 1983009808
    %v135 = vunpack.c.0.s8 %v134
    %v136 = vlaneseq
    %v137 = vshrl.u32 %v136, 7
    %v138 = vsub.s32 %v135, %v137
    %v139 = vrot.slane %v131, %v138
    %v141 = vunpack.c.l.s4 1983009808
    %v142 = vunpack.c.0.s8 %v141
    %v143 = vlaneseq
    %v144 = vshrl.u32 %v143, 7
    %v145 = vsub.s32 %v142, %v144
    %v146 = vrot.slane %v132, %v145
    %v147 = vcombine.low %v139, %v146
    %v148 = vcombine.low %v29, %v30
    %v149 = vcombine.low %v31, %v32
    %v151 = vunpack.c.l.s4 1983009808
    %v152 = vunpack.c.0.s8 %v151
    %v153 = vlaneseq
    %v154 = vshrl.u32 %v153, 7
    %v155 = vsub.s32 %v152, %v154
    %v156 = vrot.slane %v148, %v155
    %v158 = vunpack.c.l.s4 1983009808
    %v159 = vunpack.c.0.s8 %v158
    %v160 = vlaneseq
    %v161 = vshrl.u32 %v160, 7
    %v162 = vsub.s32 %v159, %v161
    %v163 = vrot.slane %v149, %v162
    %v164 = vcombine.low %v156, %v163
    %v166 = vcombine.low %v120, %v120
    %v168 = vunpack.c.l.s4 1983009808
    %v169 = vunpack.c.0.s8 %v168
    %v170 = vlaneseq
    %v171 = vshrl.u32 %v170, 7
    %v172 = vsub.s32 %v169, %v171
    %v173 = vrot.slane %v166, %v172
    %v174 = vcombine.low %v173, %v173
    %v176 = vsel %vm49, %v147, 0
    %v178 = vsel %vm49, %v164, 0
    %180 = vmatprep.subr.mxu0 0.0
    %181 = vmatpush1.msra.mxu0 %v37
    %182 = vmatprep.subr.mxu0 0.0
    %183 = vmatpush1.msra.mxu0 %v38
    %184 = vmatprep.subr.mxu0 0.0
    %185 = vmatpush1.msra.mxu0 %v39
    %186 = vmatprep.subr.mxu0 0.0
    %187 = vmatpush1.msra.mxu0 %v40
    %188 = vmatprep.subr.mxu0 0.0
    %189 = vmatpush1.msra.mxu0 0.0
    %190 = vmatprep.subr.mxu0 0.0
    %191 = vmatpush1.msra.mxu0 0.0
    %192 = vmatprep.subr.mxu0 0.0
    %193 = vmatpush1.msra.mxu0 0.0
    %194 = vmatprep.subr.mxu0 0.0
    %195 = vmatpush1.msra.mxu0 0.0
    %196 = vmatprep.subr.mxu0 0.0
    %197 = vmatpush1.msra.mxu0 0.0
    %198 = vmatprep.subr.mxu0 0.0
    %199 = vmatpush1.msra.mxu0 0.0
    %200 = vmatprep.subr.mxu0 0.0
    %201 = vmatpush1.msra.mxu0 0.0
    %202 = vmatprep.subr.mxu0 0.0
    %203 = vmatpush1.msra.mxu0 0.0
    %204 = vmatprep.subr.mxu0 0.0
    %205 = vmatpush1.msra.mxu0 0.0
    %206 = vmatprep.subr.mxu0 0.0
    %207 = vmatpush1.msra.mxu0 0.0
    %208 = vmatprep.subr.mxu0 0.0
    %209 = vmatpush1.msra.mxu0 0.0
    %210 = vmatprep.subr.mxu0 0.0
    %211 = vmatpush1.msra.mxu0 0.0
    %212 = vmatprep.subr.mxu0 0.0
    %213 = vmatpush1.msra.mxu0 0.0
    %214 = vmatprep.subr.mxu0 0.0
    %215 = vmatpush1.msra.mxu0 0.0
    %216 = vmatprep.subr.mxu0 0.0
    %217 = vmatpush1.msra.mxu0 0.0
    %218 = vmatprep.subr.mxu0 0.0
    %219 = vmatpush1.msra.mxu0 0.0
    %220 = vmatprep.subr.mxu0 0.0
    %221 = vmatpush1.msra.mxu0 0.0
    %222 = vmatprep.subr.mxu0 0.0
    %223 = vmatpush1.msra.mxu0 0.0
    %224 = vmatprep.subr.mxu0 0.0
    %225 = vmatpush1.msra.mxu0 0.0
    %226 = vmatprep.subr.mxu0 0.0
    %227 = vmatpush1.msra.mxu0 0.0
    %228 = vmatprep.subr.mxu0 0.0
    %229 = vmatpush1.msra.mxu0 0.0
    %230 = vmatprep.subr.mxu0 0.0
    %231 = vmatpush1.msra.mxu0 0.0
    %232 = vmatprep.subr.mxu0 0.0
    %233 = vmatpush1.msra.mxu0 0.0
    %234 = vmatprep.subr.mxu0 0.0
    %235 = vmatpush1.msra.mxu0 0.0
    %236 = vmatprep.subr.mxu0 0.0
    %237 = vmatpush1.msra.mxu0 0.0
    %238 = vmatprep.subr.mxu0 0.0
    %239 = vmatpush1.msra.mxu0 0.0
    %240 = vmatprep.subr.mxu0 0.0
    %241 = vmatpush1.msra.mxu0 0.0
    %242 = vmatprep.subr.mxu0 0.0
    %243 = vmatpush1.msra.mxu0 0.0
    %244 = vmatprep.mubr.f32.mxu0 0.0
    %245 = vmatmul.mubr.f32.gmra.mrb[0].mxu0 %v176
    %v246 = vpop.f32.mrb[0].mxu0
    %v247 = vadd.f32 %v174, %v246
    %v248 = vpop.f32.mrb[0].mxu0
    %249 = vmatprep.mubr.f32.mxu0 0.0
    %250 = vmatmul.mubr.f32.gmra.mrb[0].mxu0 %v178
    %v251 = vpop.f32.mrb[0].mxu0
    %v252 = vadd.f32 %v174, %v251
    %v253 = vpop.f32.mrb[0].mxu0
    %254 = vdwg.mxu0
    %v257 = vcombine.high %v247, %v247
    %v259 = vunpack.c.l.s4 1983009808
    %v260 = vunpack.c.0.s8 %v259
    %v261 = vlaneseq
    %v262 = vshrl.u32 %v261, 7
    %v263 = vsub.s32 %v260, %v262
    %v264 = vrot.slane %v247, %v263
    %v266 = vunpack.c.l.s4 1983009808
    %v267 = vunpack.c.0.s8 %v266
    %v268 = vlaneseq
    %v269 = vshrl.u32 %v268, 7
    %v270 = vsub.s32 %v267, %v269
    %v271 = vrot.slane %v257, %v270
    %v272 = vcombine.high %v264, %v264
    %v273 = vcombine.high %v271, %v271
    %v274 = vcombine.high %v252, %v252
    %v276 = vunpack.c.l.s4 1983009808
    %v277 = vunpack.c.0.s8 %v276
    %v278 = vlaneseq
    %v279 = vshrl.u32 %v278, 7
    %v280 = vsub.s32 %v277, %v279
    %v281 = vrot.slane %v252, %v280
    %v283 = vunpack.c.l.s4 1983009808
    %v284 = vunpack.c.0.s8 %v283
    %v285 = vlaneseq
    %v286 = vshrl.u32 %v285, 7
    %v287 = vsub.s32 %v284, %v286
    %v288 = vrot.slane %v274, %v287
    %v289 = vcombine.high %v281, %v281
    %v290 = vcombine.high %v288, %v288
    %v299 = vtanh.pop %v264
    %v300 = vtanh.pop %v272
    %v301 = vtanh.pop %v271
    %v302 = vtanh.pop %v273
    %v303 = vtanh.pop %v281
    %v304 = vtanh.pop %v289
    %v305 = vtanh.pop %v288
    %v306 = vtanh.pop %v290
    %v308 = vlaneseq
    %v309 = vshrl.u32 %v308, 7
    %v310 = vsub.s32 0, %v309
    %v311 = vrot.slane %v41, %v310
    %v313 = vmul.f32 %v299, %v311
    %v314 = vmul.f32 %v300, %v311
    %v315 = vmul.f32 %v301, %v311
    %v316 = vmul.f32 %v302, %v311
    %v317 = vmul.f32 %v303, %v311
    %v318 = vmul.f32 %v304, %v311
    %v319 = vmul.f32 %v305, %v311
    %v320 = vmul.f32 %v306, %v311
    %vm321 = vcmask 254976
    %v322 = vsel %vm321, %v313, 0.0
    %323 = vadd.xlane.f32.xlu0 %v322
    %v324 = vpop.xlane.xlu0 %323
    %v325 = vsel %vm321, %v314, 0.0
    %326 = vadd.xlane.f32.xlu0 %v325
    %v327 = vpop.xlane.xlu0 %326
    %v328 = vsel %vm321, %v315, 0.0
    %329 = vadd.xlane.f32.xlu0 %v328
    %v330 = vpop.xlane.xlu0 %329
    %v331 = vsel %vm321, %v316, 0.0
    %332 = vadd.xlane.f32.xlu0 %v331
    %v333 = vpop.xlane.xlu0 %332
    %v334 = vsel %vm321, %v317, 0.0
    %335 = vadd.xlane.f32.xlu0 %v334
    %v336 = vpop.xlane.xlu0 %335
    %v337 = vsel %vm321, %v318, 0.0
    %338 = vadd.xlane.f32.xlu0 %v337
    %v339 = vpop.xlane.xlu0 %338
    %v340 = vsel %vm321, %v319, 0.0
    %341 = vadd.xlane.f32.xlu0 %v340
    %v342 = vpop.xlane.xlu0 %341
    %v343 = vsel %vm321, %v320, 0.0
    %344 = vadd.xlane.f32.xlu0 %v343
    %v345 = vpop.xlane.xlu0 %344
    %v354 = vlaneseq
    %v355 = vand.u32 %v354, 127
    %v356 = vlaneseq
    %v357 = vshrl.u32 %v356, 7
    %v358 = vsub.s32 %v355, %v357
    %v359 = vrot.slane %v324, %v358
    %v360 = vlaneseq
    %v361 = vshrl.u32 %v360, 7
    %v362 = vsub.s32 %v355, %v361
    %v363 = vrot.slane %v327, %v362
    %v364 = vlaneseq
    %v365 = vshrl.u32 %v364, 7
    %v366 = vsub.s32 %v355, %v365
    %v367 = vrot.slane %v330, %v366
    %v368 = vlaneseq
    %v369 = vshrl.u32 %v368, 7
    %v370 = vsub.s32 %v355, %v369
    %v371 = vrot.slane %v333, %v370
    %v372 = vlaneseq
    %v373 = vshrl.u32 %v372, 7
    %v374 = vsub.s32 %v355, %v373
    %v375 = vrot.slane %v336, %v374
    %v376 = vlaneseq
    %v377 = vshrl.u32 %v376, 7
    %v378 = vsub.s32 %v355, %v377
    %v379 = vrot.slane %v339, %v378
    %v380 = vlaneseq
    %v381 = vshrl.u32 %v380, 7
    %v382 = vsub.s32 %v355, %v381
    %v383 = vrot.slane %v342, %v382
    %v384 = vlaneseq
    %v385 = vshrl.u32 %v384, 7
    %v386 = vsub.s32 %v355, %v385
    %v387 = vrot.slane %v345, %v386
    %vm388 = vcmask 1041409
    %v389 = vsel %vm388, %v363, %v359
    %vm390 = vcmask 1042434
    %v391 = vsel %vm390, %v367, %v389
    %vm392 = vcmask 1043459
    %v393 = vsel %vm392, %v371, %v391
    %vm394 = vcmask 1044484
    %v395 = vsel %vm394, %v375, %v393
    %vm396 = vcmask 1045509
    %v397 = vsel %vm396, %v379, %v395
    %vm398 = vcmask 1046534
    %v399 = vsel %vm398, %v383, %v397
    %vm400 = vcmask 1047559
    %v401 = vsel %vm400, %v387, %v399
    %403 = vxpose.xlu0.b32.start [1/16] %v401, 128
    %404 = vxpose.xlu0.b32.cont [2/16] 0.0, 128
    %405 = vxpose.xlu0.b32.cont [3/16] 0.0, 128
    %406 = vxpose.xlu0.b32.cont [4/16] 0.0, 128
    %407 = vxpose.xlu0.b32.cont [5/16] 0.0, 128
    %408 = vxpose.xlu0.b32.cont [6/16] 0.0, 128
    %409 = vxpose.xlu0.b32.cont [7/16] 0.0, 128
    %410 = vxpose.xlu0.b32.cont [8/16] 0.0, 128
    %411 = vxpose.xlu0.b32.cont [9/16] 0.0, 128
    %412 = vxpose.xlu0.b32.cont [10/16] 0.0, 128
    %413 = vxpose.xlu0.b32.cont [11/16] 0.0, 128
    %414 = vxpose.xlu0.b32.cont [12/16] 0.0, 128
    %415 = vxpose.xlu0.b32.cont [13/16] 0.0, 128
    %416 = vxpose.xlu0.b32.cont [14/16] 0.0, 128
    %417 = vxpose.xlu0.b32.cont [15/16] 0.0, 128
    %418 = vxpose.xlu0.b32.end [16/16] 0.0, 128
    %v419 = vpop.trf.xlu0
    %v420 = vpop.trf.xlu0
    %v421 = vpop.trf.xlu0
    %v422 = vpop.trf.xlu0
    %v423 = vpop.trf.xlu0
    %v424 = vpop.trf.xlu0
    %v425 = vpop.trf.xlu0
    %v426 = vpop.trf.xlu0
    %v427 = vpop.trf.xlu0
    %v428 = vpop.trf.xlu0
    %v429 = vpop.trf.xlu0
    %v430 = vpop.trf.xlu0
    %v431 = vpop.trf.xlu0
    %v432 = vpop.trf.xlu0
    %v433 = vpop.trf.xlu0
    %v434 = vpop.trf.xlu0
    %vm435 = vcmask 58368
    %v436 = vsel %vm435, %v419, -inf
    %437 = vmax.xlane.f32.xlu0 %v436
    %v438 = vpop.xlane.xlu0 %437
    %v439 = vsub.f32 %v419, %v438
    %v440 = vmul.f32 %v439, 1.442695
    %v441 = vpow.pop %v440
    %v442 = vsel %vm435, %v441, 0.0
    %443 = vadd.xlane.f32.xlu0 %v442
    %v444 = vpop.xlane.xlu0 %443
    %v445 = vrcp.pop %v444
    %v446 = vmul.f32 %v441, %v445
    %447 = vst.msk [vmem:[#allocation2] sm:$0x3] %vm435, %v446
    // Predicated region
    $region26: #{attention_forward.1} parent=1 // pred_check
      _
    $region27: #{attention_forward.1} parent=1 // pred_check_branch
      %449 = sbr.rel (0) target = $region29
    $region28: #{attention_forward.1} parent=1 // pred_region
      %s451 = ssub.s32 32, 32
      %452 = vsyncadd [#allocation3], %s451
      %s454 = sshll.u32 [#allocation2], 4
      %s455 = int_to_ptr.vmem [resolvable:$true] %s454
      %457 = dma.vmem_to_hbm [thread:$0]  %s455, 32, %s6, [#allocation3]
    $region29: #{attention_forward.1} parent=1 // pred_fallthru
      _
    // Predicated region
    $region30: #{attention_forward.1} parent=1 // pred_check
      _
    $region31: #{attention_forward.1} parent=1 // pred_check_branch
      %459 = sbr.rel (0) target = $region33
    $region32: #{attention_forward.1} parent=1 // pred_region
      %460 = dma.done [#allocation3], 32
    $region33: #{attention_forward.1} parent=1 // pred_fallthru
      _
    %461 = vsyncpa [#allocation3], 1

</llo_original>
